<compile_context>
chip_gen: v7x
topology: tpu7x:2x2x1
jax: 0.10.0
libtpu: 0.0.40
codegen_flags: <defaults>
</compile_context>

<pallas_src>
import functools

import jax
import jax.numpy as jnp
from jax.experimental import pallas as pl
from jax.experimental.pallas import tpu as pltpu


def _outconv_kernel(w_ref, b_ref, x_ref, o_ref):
    """One (Cin, T) -> (Cout, T) tile of the 1x1x1 conv.

    w_ref: SMEM (Cout, Cin) weight scalars
    b_ref: SMEM (Cout,)     bias scalars
    x_ref: VMEM (Cin, T)    activation tile (spatial on lanes)
    o_ref: VMEM (Cout, T)   output tile (lane-dense last dim)
    """
    cout, cin = w_ref.shape
    # Load each input-channel row once; each row is (1, T), lane-dense.
    x_rows = [x_ref[pl.ds(ci, 1), :].astype(jnp.float32) for ci in range(cin)]
    for co in range(cout):                      # static Python loops: Cout*Cin FMAs
        acc = x_rows[0] * w_ref[co, 0]
        for ci in range(1, cin):
            acc = acc + x_rows[ci] * w_ref[co, ci]
        o_ref[pl.ds(co, 1), :] = (acc + b_ref[co]).astype(o_ref.dtype)


@functools.partial(jax.jit, static_argnames=("max_lane_tile",))
def outconv_forward(x_ncdhw, weight, bias, *, max_lane_tile=64 * 1024):
    """Forward pass of OutConv (Conv3d, kernel_size=1).

    Args:
      x_ncdhw: (N, Cin, D, H, W) input, PyTorch NCDHW convention.
      weight:  (Cout, Cin, 1, 1, 1) Conv3d weight.
      bias:    (Cout,) bias.
    Returns:
      (N, Cout, D, H, W) output.
    """
    N, Cin, D, H, W = x_ncdhw.shape
    Cout = weight.shape[0]
    DHW = D * H * W

    # Contiguous reshapes only (no transposes / extra HBM traffic).
    x_flat = x_ncdhw.reshape(N, Cin, DHW)
    w_mat = weight.reshape(Cout, Cin).astype(jnp.float32)
    b_vec = bias.astype(jnp.float32)

    # Spatial (lane) tile: full extent if small, otherwise a large multiple of
    # 128 so stores stay lane-dense and the ~0.35us/step overhead is amortized.
    # Per-step VMEM working set stays at a few MiB (fits v7x's 64 MiB VMEM
    # with double-buffering headroom).
    if DHW <= max_lane_tile:
        T = DHW
    else:
        T = max_lane_tile                       # multiple of 128
    n_spatial_tiles = pl.cdiv(DHW, T)

    out_flat = pl.pallas_call(
        _outconv_kernel,
        out_shape=jax.ShapeDtypeStruct((N, Cout, DHW), x_ncdhw.dtype),
        grid_spec=pltpu.PrefetchScalarGridSpec(
            num_scalar_prefetch=0,
            grid=(N, n_spatial_tiles),
            in_specs=[
                # Tiny weight / bias: resident SMEM scalars, no per-step DMA.
                pl.BlockSpec(memory_space=pltpu.MemorySpace.SMEM),
                pl.BlockSpec(memory_space=pltpu.MemorySpace.SMEM),
                # Streaming activation tile: (Cin, T), spatial on lanes.
                pl.BlockSpec((None, Cin, T), lambda n, s: (n, 0, s)),
            ],
            out_specs=pl.BlockSpec((None, Cout, T), lambda n, s: (n, 0, s)),
        ),
        compiler_params=pltpu.CompilerParams(
            dimension_semantics=("parallel", "parallel"),
            vmem_limit_bytes=32 * 1024 * 1024,
        ),
    )(w_mat, b_vec, x_flat)

    return out_flat.reshape(N, Cout, D, H, W)


if __name__ == "__main__":
    # Small shapes consistent with OutConv: 5-D NCDHW input.
    N, Cin, Cout = 2, 4, 3
    D, H, W = 4, 8, 8

    key = jax.random.PRNGKey(0)
    kx, kw, kb = jax.random.split(key, 3)

    x = jax.random.normal(kx, (N, Cin, D, H, W), dtype=jnp.float32)
    # Deterministic parameter init (mimics Conv3d's uniform init, 1/sqrt(fan_in)).
    fan_in = Cin * 1 * 1 * 1
    bound = 1.0 / (fan_in ** 0.5)
    weight = jax.random.uniform(kw, (Cout, Cin, 1, 1, 1), dtype=jnp.float32,
                                minval=-bound, maxval=bound)
    bias = jax.random.uniform(kb, (Cout,), dtype=jnp.float32,
                              minval=-bound, maxval=bound)

    out = outconv_forward(x, weight, bias)
    out = jax.block_until_ready(out)

    # Pure-JAX reference of the same conv.
    ref = jnp.einsum("ncdhw,oc->nodhw", x, weight.reshape(Cout, Cin)) \
          + bias[None, :, None, None, None]
    assert out.shape == (N, Cout, D, H, W)
    assert jnp.allclose(out, ref, atol=1e-5, rtol=1e-5)

    print("KERNEL_OK")
</pallas_src>

<mosaic_0001>
module attributes {stable_mosaic.version = 11 : i64} {
  func.func @_outconv_kernel(%arg0: i32, %arg1: i32, %arg2: memref<3x4xf32, #tpu.memory_space<smem>>, %arg3: memref<3xf32, #tpu.memory_space<smem>>, %arg4: memref<1x4x256xf32, #tpu.memory_space<vmem>>, %arg5: memref<1x3x256xf32, #tpu.memory_space<vmem>>) attributes {dimension_semantics = [#tpu.dimension_semantics<parallel>, #tpu.dimension_semantics<parallel>], iteration_bounds = array<i64: 2, 1>, scalar_prefetch = 0 : i64, scratch_operands = 0 : i64, tpu.core_type = #tpu.core_type<tc>, window_params = [{transform_indices = @transform_0, window_bounds = array<i64: 3, 4>}, {transform_indices = @transform_1, window_bounds = array<i64: 3>}, {transform_indices = @transform_2, window_bounds = array<i64: 1, 4, 256>}, {transform_indices = @transform_3, window_bounds = array<i64: 1, 3, 256>}]} {
    %c0 = arith.constant 0 : index
    %c0_0 = arith.constant 0 : index
    %c0_1 = arith.constant 0 : index
    %0 = vector.load %arg4[%c0, %c0_0, %c0_1] : memref<1x4x256xf32, #tpu.memory_space<vmem>>, vector<1x1x256xf32>
    %1 = vector.shape_cast %0 : vector<1x1x256xf32> to vector<1x256xf32>
    %c0_2 = arith.constant 0 : index
    %c1 = arith.constant 1 : index
    %c0_3 = arith.constant 0 : index
    %2 = vector.load %arg4[%c0_2, %c1, %c0_3] : memref<1x4x256xf32, #tpu.memory_space<vmem>>, vector<1x1x256xf32>
    %3 = vector.shape_cast %2 : vector<1x1x256xf32> to vector<1x256xf32>
    %c0_4 = arith.constant 0 : index
    %c2 = arith.constant 2 : index
    %c0_5 = arith.constant 0 : index
    %4 = vector.load %arg4[%c0_4, %c2, %c0_5] : memref<1x4x256xf32, #tpu.memory_space<vmem>>, vector<1x1x256xf32>
    %5 = vector.shape_cast %4 : vector<1x1x256xf32> to vector<1x256xf32>
    %c0_6 = arith.constant 0 : index
    %c3 = arith.constant 3 : index
    %c0_7 = arith.constant 0 : index
    %6 = vector.load %arg4[%c0_6, %c3, %c0_7] : memref<1x4x256xf32, #tpu.memory_space<vmem>>, vector<1x1x256xf32>
    %7 = vector.shape_cast %6 : vector<1x1x256xf32> to vector<1x256xf32>
    %c0_8 = arith.constant 0 : index
    %c0_9 = arith.constant 0 : index
    %8 = memref.load %arg2[%c0_8, %c0_9] : memref<3x4xf32, #tpu.memory_space<smem>>
    %9 = vector.broadcast %8 : f32 to vector<1x256xf32>
    %10 = arith.mulf %1, %9 : vector<1x256xf32>
    %c0_10 = arith.constant 0 : index
    %c1_11 = arith.constant 1 : index
    %11 = memref.load %arg2[%c0_10, %c1_11] : memref<3x4xf32, #tpu.memory_space<smem>>
    %12 = vector.broadcast %11 : f32 to vector<1x256xf32>
    %13 = arith.mulf %3, %12 : vector<1x256xf32>
    %14 = arith.addf %10, %13 : vector<1x256xf32>
    %c0_12 = arith.constant 0 : index
    %c2_13 = arith.constant 2 : index
    %15 = memref.load %arg2[%c0_12, %c2_13] : memref<3x4xf32, #tpu.memory_space<smem>>
    %16 = vector.broadcast %15 : f32 to vector<1x256xf32>
    %17 = arith.mulf %5, %16 : vector<1x256xf32>
    %18 = arith.addf %14, %17 : vector<1x256xf32>
    %c0_14 = arith.constant 0 : index
    %c3_15 = arith.constant 3 : index
    %19 = memref.load %arg2[%c0_14, %c3_15] : memref<3x4xf32, #tpu.memory_space<smem>>
    %20 = vector.broadcast %19 : f32 to vector<1x256xf32>
    %21 = arith.mulf %7, %20 : vector<1x256xf32>
    %22 = arith.addf %18, %21 : vector<1x256xf32>
    %c0_16 = arith.constant 0 : index
    %23 = memref.load %arg3[%c0_16] : memref<3xf32, #tpu.memory_space<smem>>
    %24 = vector.broadcast %23 : f32 to vector<1x256xf32>
    %25 = arith.addf %22, %24 : vector<1x256xf32>
    %c0_17 = arith.constant 0 : index
    %c0_18 = arith.constant 0 : index
    %c0_19 = arith.constant 0 : index
    %26 = vector.load %arg5[%c0_17, %c0_18, %c0_19] : memref<1x3x256xf32, #tpu.memory_space<vmem>>, vector<1x1x256xf32>
    %27 = vector.shape_cast %26 : vector<1x1x256xf32> to vector<1x256xf32>
    %28 = vector.shape_cast %25 : vector<1x256xf32> to vector<1x1x256xf32>
    tpu.vector_store %arg5[%c0_17, %c0_18, %c0_19], %28 {strides = array<i32>} : memref<1x3x256xf32, #tpu.memory_space<vmem>>, vector<1x1x256xf32>,
    %c1_20 = arith.constant 1 : index
    %c0_21 = arith.constant 0 : index
    %29 = memref.load %arg2[%c1_20, %c0_21] : memref<3x4xf32, #tpu.memory_space<smem>>
    %30 = vector.broadcast %29 : f32 to vector<1x256xf32>
    %31 = arith.mulf %1, %30 : vector<1x256xf32>
    %c1_22 = arith.constant 1 : index
    %c1_23 = arith.constant 1 : index
    %32 = memref.load %arg2[%c1_22, %c1_23] : memref<3x4xf32, #tpu.memory_space<smem>>
    %33 = vector.broadcast %32 : f32 to vector<1x256xf32>
    %34 = arith.mulf %3, %33 : vector<1x256xf32>
    %35 = arith.addf %31, %34 : vector<1x256xf32>
    %c1_24 = arith.constant 1 : index
    %c2_25 = arith.constant 2 : index
    %36 = memref.load %arg2[%c1_24, %c2_25] : memref<3x4xf32, #tpu.memory_space<smem>>
    %37 = vector.broadcast %36 : f32 to vector<1x256xf32>
    %38 = arith.mulf %5, %37 : vector<1x256xf32>
    %39 = arith.addf %35, %38 : vector<1x256xf32>
    %c1_26 = arith.constant 1 : index
    %c3_27 = arith.constant 3 : index
    %40 = memref.load %arg2[%c1_26, %c3_27] : memref<3x4xf32, #tpu.memory_space<smem>>
    %41 = vector.broadcast %40 : f32 to vector<1x256xf32>
    %42 = arith.mulf %7, %41 : vector<1x256xf32>
    %43 = arith.addf %39, %42 : vector<1x256xf32>
    %c1_28 = arith.constant 1 : index
    %44 = memref.load %arg3[%c1_28] : memref<3xf32, #tpu.memory_space<smem>>
    %45 = vector.broadcast %44 : f32 to vector<1x256xf32>
    %46 = arith.addf %43, %45 : vector<1x256xf32>
    %c0_29 = arith.constant 0 : index
    %c1_30 = arith.constant 1 : index
    %c0_31 = arith.constant 0 : index
    %47 = vector.load %arg5[%c0_29, %c1_30, %c0_31] : memref<1x3x256xf32, #tpu.memory_space<vmem>>, vector<1x1x256xf32>
    %48 = vector.shape_cast %47 : vector<1x1x256xf32> to vector<1x256xf32>
    %49 = vector.shape_cast %46 : vector<1x256xf32> to vector<1x1x256xf32>
    tpu.vector_store %arg5[%c0_29, %c1_30, %c0_31], %49 {strides = array<i32>} : memref<1x3x256xf32, #tpu.memory_space<vmem>>, vector<1x1x256xf32>,
    %c2_32 = arith.constant 2 : index
    %c0_33 = arith.constant 0 : index
    %50 = memref.load %arg2[%c2_32, %c0_33] : memref<3x4xf32, #tpu.memory_space<smem>>
    %51 = vector.broadcast %50 : f32 to vector<1x256xf32>
    %52 = arith.mulf %1, %51 : vector<1x256xf32>
    %c2_34 = arith.constant 2 : index
    %c1_35 = arith.constant 1 : index
    %53 = memref.load %arg2[%c2_34, %c1_35] : memref<3x4xf32, #tpu.memory_space<smem>>
    %54 = vector.broadcast %53 : f32 to vector<1x256xf32>
    %55 = arith.mulf %3, %54 : vector<1x256xf32>
    %56 = arith.addf %52, %55 : vector<1x256xf32>
    %c2_36 = arith.constant 2 : index
    %c2_37 = arith.constant 2 : index
    %57 = memref.load %arg2[%c2_36, %c2_37] : memref<3x4xf32, #tpu.memory_space<smem>>
    %58 = vector.broadcast %57 : f32 to vector<1x256xf32>
    %59 = arith.mulf %5, %58 : vector<1x256xf32>
    %60 = arith.addf %56, %59 : vector<1x256xf32>
    %c2_38 = arith.constant 2 : index
    %c3_39 = arith.constant 3 : index
    %61 = memref.load %arg2[%c2_38, %c3_39] : memref<3x4xf32, #tpu.memory_space<smem>>
    %62 = vector.broadcast %61 : f32 to vector<1x256xf32>
    %63 = arith.mulf %7, %62 : vector<1x256xf32>
    %64 = arith.addf %60, %63 : vector<1x256xf32>
    %c2_40 = arith.constant 2 : index
    %65 = memref.load %arg3[%c2_40] : memref<3xf32, #tpu.memory_space<smem>>
    %66 = vector.broadcast %65 : f32 to vector<1x256xf32>
    %67 = arith.addf %64, %66 : vector<1x256xf32>
    %c0_41 = arith.constant 0 : index
    %c2_42 = arith.constant 2 : index
    %c0_43 = arith.constant 0 : index
    %68 = vector.load %arg5[%c0_41, %c2_42, %c0_43] : memref<1x3x256xf32, #tpu.memory_space<vmem>>, vector<1x1x256xf32>
    %69 = vector.shape_cast %68 : vector<1x1x256xf32> to vector<1x256xf32>
    %70 = vector.shape_cast %67 : vector<1x256xf32> to vector<1x1x256xf32>
    tpu.vector_store %arg5[%c0_41, %c2_42, %c0_43], %70 {strides = array<i32>} : memref<1x3x256xf32, #tpu.memory_space<vmem>>, vector<1x1x256xf32>,
    return
  }
  func.func @transform_0(%arg0: i32, %arg1: i32) -> (i32, i32) {
    %c0_i32 = arith.constant 0 : i32
    %c0_i32_0 = arith.constant 0 : i32
    %c0_i32_1 = arith.constant 0 : i32
    return %c0_i32, %c0_i32_0 : i32, i32
  }
  func.func @transform_1(%arg0: i32, %arg1: i32) -> i32 {
    %c0_i32 = arith.constant 0 : i32
    %c0_i32_0 = arith.constant 0 : i32
    return %c0_i32 : i32
  }
  func.func @transform_2(%arg0: i32, %arg1: i32) -> (i32, i32, i32) {
    %c0_i32 = arith.constant 0 : i32
    %c0_i32_0 = arith.constant 0 : i32
    return %arg0, %c0_i32, %arg1 : i32, i32, i32
  }
  func.func @transform_3(%arg0: i32, %arg1: i32) -> (i32, i32, i32) {
    %c0_i32 = arith.constant 0 : i32
    %c0_i32_0 = arith.constant 0 : i32
    return %arg0, %c0_i32, %arg1 : i32, i32, i32
  }
}

</mosaic_0001>

<llo_original>
// kernel: outconv_forward.1
$region0: #{outconv_forward.1}
  #allocation0 [shape = 'u32[]', space=smem, size = 0x4, offset = 0x4, fixed_abs, tag = 'smem constant byte address 0x4 - core index']
  #allocation1 [shape = 'u32[144,128]{1,0:T(1,128)}', space=vmem, size = 0x12000, scoped, tag = 'internal scratch']
  %s0 = inlined_call_operand.vmem [shape: f32[3,4], index: 0, kind: input, shape index: {}]
  %s1 = inlined_call_operand.vmem [shape: f32[3], index: 1, kind: input, shape index: {}]
  %s2 = inlined_call_operand.vmem [shape: f32[2,4,256], index: 2, kind: input, shape index: {}]
  %s3 = inlined_call_operand.vmem [shape: f32[2,3,256], index: 3, kind: output, shape index: {}]
  %s4 = sld [smem:[#allocation0]]
  $region53: #{outconv_forward.1} parent=0
    _
  %s6 = ssub.s32 1, %s4
  %s7 = scalar_select 0, %s6, %s4
  $region1: #{outconv_forward.1} parent=0
    #allocation2 [shape = 'u8[2048]{0}', space=smem, size = 0x800, scoped, tag = 'input window, operand 0, single buffered']
    #allocation3 [shape = 's32[2]{0}', space=sflag, size = 0x8, scoped, tag = 'scoped memory for outconv_forward.1']
    #allocation4 [shape = 'u8[512]{0}', space=smem, size = 0x200, scoped, tag = 'input window, operand 1, single buffered']
    #allocation5 [shape = 's32[1]{0}', space=sflag, size = 0x4, scoped, tag = 'scoped memory for outconv_forward.1']
    %8 = vsyncpa [#allocation3], 0
    %9 = vsyncpa [#allocation5], 0
    loop: start=0, step=1, limit=4
    $region2: #{outconv_forward.1} parent=1 // loop_pre_header
      _
    $region3: #{outconv_forward.1} parent=1 // loop_header
      %s11 = sphi 0, %s15
      %p12 = scmp.ge.s32.totalorder %s11, 4
      %s18 = sphi 0, %s30
      %s19 = sphi 0, %s26
      %s20 = sphi 0, %s18
      %s21 = sphi 0, %s19
      %s22 = sphi 0, %s20
      %s23 = sphi 0, %s21
      %s31 = sphi 0, %s31
      %s33 = sphi 0, %s31
      %s34 = sphi 0, %s33
      %s48 = sphi 0, %s34
      %s52 = sphi 0, %s52
      %s54 = sphi 0, %s52
      %s55 = sphi 0, %s54
      %s69 = sphi 0, %s55
      %s77 = sphi 0, %s79
      %s80 = sphi 0, %s77
      %s81 = sphi 0, %s80
      %s97 = sphi 0, %s81
      %s105 = sphi 0, %s107
      %s108 = sphi 0, %s105
      %s109 = sphi 0, %s108
      %s125 = sphi 0, %s109
    $region4: #{outconv_forward.1} parent=1 // loop_header_branch
      %14 = sbr.rel (%p12) target = $region8
    $region5: #{outconv_forward.1} parent=1 // loop_body
      %s16 = ssub.s32 %s11, 1
      %s17 = ssub.s32 %s11, 2
      %s24 = sadd.s32 1, %s19
      %p25 = scmp.ge.s32.totalorder %s24, 1
      %s26 = scalar_select %p25, 0, %s24
      %s27 = sadd.s32 1, %s18
      %s28 = scalar_select %p25, %s27, %s18
      %p29 = scmp.ge.s32.totalorder %s28, 2
      %s30 = scalar_select %p29, 0, %s28
      %s32 = sadd.s32 %s31, 1
      %p35 = scmp.eq.s32.totalorder %s11, 1
      %p36 = scmp.ne.s32.totalorder %s31, %s33
      %p37 = scmp.eq.s32.totalorder %s11, 0
      %p38 = por %p36, %p37
      %p39 = scmp.ne.s32.totalorder %s31, %s33
      %p40 = scmp.eq.s32.totalorder %s16, 1
      %p41 = por %p39, %p40
      %p42 = scmp.ne.s32.totalorder %s33, %s34
      %p43 = scmp.eq.s32.totalorder %s16, 0
      %p44 = por %p42, %p43
      %p45 = scmp.ne.s32.totalorder %s33, %s34
      %p46 = scmp.eq.s32.totalorder %s17, 1
      %p47 = por %p45, %p46
      %p49 = scmp.ne.s32.totalorder %s34, %s48
      %p50 = scmp.eq.s32.totalorder %s17, 0
      %p51 = por %p49, %p50
      %s53 = sadd.s32 %s52, 1
      %p56 = scmp.eq.s32.totalorder %s11, 1
      %p57 = scmp.ne.s32.totalorder %s52, %s54
      %p58 = scmp.eq.s32.totalorder %s11, 0
      %p59 = por %p57, %p58
      %p60 = scmp.ne.s32.totalorder %s52, %s54
      %p61 = scmp.eq.s32.totalorder %s16, 1
      %p62 = por %p60, %p61
      %p63 = scmp.ne.s32.totalorder %s54, %s55
      %p64 = scmp.eq.s32.totalorder %s16, 0
      %p65 = por %p63, %p64
      %p66 = scmp.ne.s32.totalorder %s54, %s55
      %p67 = scmp.eq.s32.totalorder %s17, 1
      %p68 = por %p66, %p67
      %p70 = scmp.ne.s32.totalorder %s55, %s69
      %p71 = scmp.eq.s32.totalorder %s17, 0
      %p72 = por %p70, %p71
      %s73 = ssub.s32 %s18, %s30
      %s74 = ssub.s32 %s19, %s26
      %s75 = sor.u32 %s73, %s74
      %p76 = scmp.eq.s32.totalorder %s75, 0
      %s78 = sadd.s32 %s77, 1
      %s79 = scalar_select %p76, %s77, %s78
      %p82 = pneg %p76
      %p83 = scmp.eq.s32.totalorder %s11, 1
      %p84 = por %p82, %p83
      %p85 = scmp.ne.s32.totalorder %s77, %s80
      %p86 = scmp.eq.s32.totalorder %s11, 0
      %p87 = por %p85, %p86
      %p88 = scmp.ne.s32.totalorder %s77, %s80
      %p89 = scmp.eq.s32.totalorder %s16, 1
      %p90 = por %p88, %p89
      %p91 = scmp.ne.s32.totalorder %s80, %s81
      %p92 = scmp.eq.s32.totalorder %s16, 0
      %p93 = por %p91, %p92
      %p94 = scmp.ne.s32.totalorder %s80, %s81
      %p95 = scmp.eq.s32.totalorder %s17, 1
      %p96 = por %p94, %p95
      %p98 = scmp.ne.s32.totalorder %s81, %s97
      %p99 = scmp.eq.s32.totalorder %s17, 0
      %p100 = por %p98, %p99
      %s101 = ssub.s32 %s18, %s30
      %s102 = ssub.s32 %s19, %s26
      %s103 = sor.u32 %s101, %s102
      %p104 = scmp.eq.s32.totalorder %s103, 0
      %s106 = sadd.s32 %s105, 1
      %s107 = scalar_select %p104, %s105, %s106
      %p110 = pneg %p104
      %p111 = scmp.eq.s32.totalorder %s11, 1
      %p112 = por %p110, %p111
      %p113 = scmp.ne.s32.totalorder %s105, %s108
      %p114 = scmp.eq.s32.totalorder %s11, 0
      %p115 = por %p113, %p114
      %p116 = scmp.ne.s32.totalorder %s105, %s108
      %p117 = scmp.eq.s32.totalorder %s16, 1
      %p118 = por %p116, %p117
      %p119 = scmp.ne.s32.totalorder %s108, %s109
      %p120 = scmp.eq.s32.totalorder %s16, 0
      %p121 = por %p119, %p120
      %p122 = scmp.ne.s32.totalorder %s108, %s109
      %p123 = scmp.eq.s32.totalorder %s17, 1
      %p124 = por %p122, %p123
      %p126 = scmp.ne.s32.totalorder %s109, %s125
      %p127 = scmp.eq.s32.totalorder %s17, 0
      %p128 = por %p126, %p127
      %p129 = scmp.le.s32.totalorder 1, %s11
      %p130 = scmp.lt.s32.totalorder %s11, 3
      %p131 = pnand %p129, %p130
      %p132 = pneg %p131
      // Predicated region
      $region9: #{outconv_forward.1} parent=5 // pred_check
        _
      $region10: #{outconv_forward.1} parent=5 // pred_check_branch
        %134 = sbr.rel (%p131) target = $region12
      $region11: #{outconv_forward.1} parent=5 // pred_region
        %s135 = ssub.s32 %s11, 1
        // Predicated region
        $region13: #{outconv_forward.1} parent=11 // pred_check
          %p136 = pneg %p44
        $region14: #{outconv_forward.1} parent=11 // pred_check_branch
          %138 = sbr.rel (%p136) target = $region16
        $region15: #{outconv_forward.1} parent=11 // pred_region
          %s140 = ssub.s32 64, 64
          %141 = vsyncadd [#allocation3], %s140
          %s143 = sshll.u32 %s0, 4
          %s144 = int_to_ptr.vmem [resolvable:$true] %s143
          %146 = dma.vmem_to_smem %s144, 64, [#allocation2], [#allocation3]
        $region16: #{outconv_forward.1} parent=11 // pred_fallthru
          _
        // Predicated region
        $region17: #{outconv_forward.1} parent=11 // pred_check
          %p147 = pneg %p65
        $region18: #{outconv_forward.1} parent=11 // pred_check_branch
          %149 = sbr.rel (%p147) target = $region20
        $region19: #{outconv_forward.1} parent=11 // pred_region
          %s151 = ssub.s32 16, 16
          %152 = vsyncadd [#allocation5], %s151
          %s154 = sshll.u32 %s1, 4
          %s155 = int_to_ptr.vmem [resolvable:$true] %s154
          %157 = dma.vmem_to_smem %s155, 16, [#allocation4], [#allocation5]
        $region20: #{outconv_forward.1} parent=11 // pred_fallthru
          _
      $region12: #{outconv_forward.1} parent=5 // pred_fallthru
        _
      %p158 = scmp.lt.s32.totalorder %s11, 2
      // Predicated region
      $region21: #{outconv_forward.1} parent=5 // pred_check
        %p159 = pneg %p158
      $region22: #{outconv_forward.1} parent=5 // pred_check_branch
        %161 = sbr.rel (%p159) target = $region24
      $region23: #{outconv_forward.1} parent=5 // pred_region
        // Predicated region
        $region25: #{outconv_forward.1} parent=23 // pred_check
          %p162 = pneg %p87
        $region26: #{outconv_forward.1} parent=23 // pred_check_branch
          %164 = sbr.rel (%p162) target = $region28
        $region27: #{outconv_forward.1} parent=23 // pred_region
          %s165 = smul.u32 2, %s19
          %p166 = scmp.lt.s32.totalorder %s18, 1
          %s167 = scalar_select %p166, %s18, 1
          %p168 = scmp.lt.s32.totalorder %s165, 1
          %s169 = scalar_select %p168, %s165, 1
          %s170 = smul.addr %s167, 2
          %s171 = sadd.s32 %s169, %s170
          %s172 = smul.addr %s171, 4
          %s173 = scalar_lea.vmem %s2, %s172
          %s174 = smul.u32 2, %s19
        $region28: #{outconv_forward.1} parent=23 // pred_fallthru
          _
      $region24: #{outconv_forward.1} parent=5 // pred_fallthru
        _
      %p175 = scmp.le.s32.totalorder 1, %s11
      %p176 = scmp.lt.s32.totalorder %s11, 3
      %p177 = pnand %p175, %p176
      %p178 = pneg %p177
      // Predicated region
      $region29: #{outconv_forward.1} parent=5 // pred_check
        _
      $region30: #{outconv_forward.1} parent=5 // pred_check_branch
        %180 = sbr.rel (%p177) target = $region32
      $region31: #{outconv_forward.1} parent=5 // pred_region
        %s181 = ssub.s32 %s11, 1
        // Predicated region
        $region33: #{outconv_forward.1} parent=31 // pred_check
          %p182 = pneg %p44
        $region34: #{outconv_forward.1} parent=31 // pred_check_branch
          %184 = sbr.rel (%p182) target = $region36
        $region35: #{outconv_forward.1} parent=31 // pred_region
          %185 = dma.done [#allocation3], 64
        $region36: #{outconv_forward.1} parent=31 // pred_fallthru
          _
        // Predicated region
        $region37: #{outconv_forward.1} parent=31 // pred_check
          %p186 = pneg %p65
        $region38: #{outconv_forward.1} parent=31 // pred_check_branch
          %188 = sbr.rel (%p186) target = $region40
        $region39: #{outconv_forward.1} parent=31 // pred_region
          %189 = dma.done [#allocation5], 16
        $region40: #{outconv_forward.1} parent=31 // pred_fallthru
          _
        %190 = sfence
        %p191 = pneg %p44
        %p192 = pneg %p41
        %p193 = pneg %p65
        %p194 = pneg %p62
        %s195 = smul.u32 2, %s21
        %p196 = scmp.lt.s32.totalorder %s20, 1
        %s197 = scalar_select %p196, %s20, 1
        %p198 = scmp.lt.s32.totalorder %s195, 1
        %s199 = scalar_select %p198, %s195, 1
        %s200 = smul.addr %s197, 2
        %s201 = sadd.s32 %s199, %s200
        %s202 = smul.addr %s201, 4
        %s203 = scalar_lea.vmem %s2, %s202
        %p204 = pneg %p93
        %p205 = pneg %p90
        %p206 = pneg %p121
        %p207 = pneg %p118
        %s208 = smul.u32 2, %s21
        %p209 = scmp.lt.s32.totalorder %s20, 1
        %s210 = scalar_select %p209, %s20, 1
        %p211 = scmp.lt.s32.totalorder %s208, 1
        %s212 = scalar_select %p211, %s208, 1
        %s213 = smul.addr %s210, 2
        %s214 = sadd.s32 %s212, %s213
        %s215 = smul.addr %s214, 4
        %s216 = scalar_lea.vmem %s3, %s215
        %s217 = smul.u32 2, %s21
        %p218 = scmp.lt.s32.totalorder %s20, 1
        %s219 = scalar_select %p218, %s20, 1
        %p220 = scmp.lt.s32.totalorder %s217, 1
        %s221 = scalar_select %p220, %s217, 1
        %s222 = smul.addr %s219, 2
        %s223 = sadd.s32 %s221, %s222
        %s224 = smul.addr %s223, 4
        %s225 = scalar_lea.vmem %s2, %s224
        %s226 = smul.u32 2, %s21
        %s227 = smul.u32 2, %s21
        %p228 = scmp.lt.s32.totalorder %s20, 1
        %s229 = scalar_select %p228, %s20, 1
        %p230 = scmp.lt.s32.totalorder %s227, 1
        %s231 = scalar_select %p230, %s227, 1
        %s232 = smul.addr %s229, 2
        %s233 = sadd.s32 %s231, %s232
        %s234 = smul.addr %s233, 4
        %s235 = scalar_lea.vmem %s3, %s234
        %s236 = smul.u32 2, %s21
        %v237 = vld [vmem:[%s225] ss:$4 sm:$0x3]
        %s238 = scalar_lea.vmem %s225, 1
        %v239 = vld [vmem:[%s238] ss:$4 sm:$0x3]
        %s240 = scalar_lea.vmem %s225, 2
        %v241 = vld [vmem:[%s240] ss:$4 sm:$0x3]
        %s242 = scalar_lea.vmem %s225, 3
        %v243 = vld [vmem:[%s242] ss:$4 sm:$0x3]
        %s244 = sld [smem:[#allocation2]]
        %v245 = vstv %s244
        %v246 = vmul.f32 %v237, %v245
        %s247 = sld [smem:[#allocation2 + $0x1]]
        %v248 = vstv %s247
        %v249 = vmul.f32 %v239, %v248
        %v250 = vadd.f32 %v246, %v249
        %s251 = sld [smem:[#allocation2 + $0x2]]
        %v252 = vstv %s251
        %v253 = vmul.f32 %v241, %v252
        %v254 = vadd.f32 %v250, %v253
        %s255 = sld [smem:[#allocation2 + $0x3]]
        %v256 = vstv %s255
        %v257 = vmul.f32 %v243, %v256
        %v258 = vadd.f32 %v254, %v257
        %s259 = sld [smem:[#allocation4]]
        %v260 = vstv %s259
        %v261 = vadd.f32 %v258, %v260
        %v262 = vlaneseq
        %vm263 = vcmp.ge.s32.totalorder %v262, 0
        %vm264 = vcmp.lt.s32.totalorder %v262, 256
        %vm265 = vmand %vm263, %vm264
        %266 = vst.msk [vmem:[%s235] ss:$4 sm:$0x3] %vm265, %v261
        %s267 = sld [smem:[#allocation2 + $0x80]]
        %v268 = vstv %s267
        %v269 = vmul.f32 %v237, %v268
        %s270 = sld [smem:[#allocation2 + $0x81]]
        %v271 = vstv %s270
        %v272 = vmul.f32 %v239, %v271
        %v273 = vadd.f32 %v269, %v272
        %s274 = sld [smem:[#allocation2 + $0x82]]
        %v275 = vstv %s274
        %v276 = vmul.f32 %v241, %v275
        %v277 = vadd.f32 %v273, %v276
        %s278 = sld [smem:[#allocation2 + $0x83]]
        %v279 = vstv %s278
        %v280 = vmul.f32 %v243, %v279
        %v281 = vadd.f32 %v277, %v280
        %s282 = sld [smem:[#allocation4 + $0x1]]
        %v283 = vstv %s282
        %v284 = vadd.f32 %v281, %v283
        %s285 = scalar_lea.vmem %s235, 1
        %286 = vst.msk [vmem:[%s285] ss:$4 sm:$0x3] %vm265, %v284
        %s287 = sld [smem:[#allocation2 + $0x100]]
        %v288 = vstv %s287
        %v289 = vmul.f32 %v237, %v288
        %s290 = sld [smem:[#allocation2 + $0x101]]
        %v291 = vstv %s290
        %v292 = vmul.f32 %v239, %v291
        %v293 = vadd.f32 %v289, %v292
        %s294 = sld [smem:[#allocation2 + $0x102]]
        %v295 = vstv %s294
        %v296 = vmul.f32 %v241, %v295
        %v297 = vadd.f32 %v293, %v296
        %s298 = sld [smem:[#allocation2 + $0x103]]
        %v299 = vstv %s298
        %v300 = vmul.f32 %v243, %v299
        %v301 = vadd.f32 %v297, %v300
        %s302 = sld [smem:[#allocation4 + $0x2]]
        %v303 = vstv %s302
        %v304 = vadd.f32 %v301, %v303
        %s305 = scalar_lea.vmem %s235, 2
        %306 = vst.msk [vmem:[%s305] ss:$4 sm:$0x3] %vm265, %v304
        %s307 = smul.u32 2, %s21
        %p308 = scmp.lt.s32.totalorder %s20, 1
        %s309 = scalar_select %p308, %s20, 1
        %p310 = scmp.lt.s32.totalorder %s307, 1
        %s311 = scalar_select %p310, %s307, 1
        %s312 = smul.addr %s309, 2
        %s313 = sadd.s32 %s311, %s312
        %s314 = smul.addr %s313, 4
        %s315 = scalar_lea.vmem %s3, %s314
        // Predicated region
        $region41: #{outconv_forward.1} parent=31 // pred_check
          %p316 = pneg %p118
        $region42: #{outconv_forward.1} parent=31 // pred_check_branch
          %318 = sbr.rel (%p316) target = $region44
        $region43: #{outconv_forward.1} parent=31 // pred_region
          %s319 = smul.u32 2, %s21
        $region44: #{outconv_forward.1} parent=31 // pred_fallthru
          _
      $region32: #{outconv_forward.1} parent=5 // pred_fallthru
        _
      %p320 = scmp.le.s32.totalorder 2, %s11
      // Predicated region
      $region45: #{outconv_forward.1} parent=5 // pred_check
        %p321 = pneg %p320
      $region46: #{outconv_forward.1} parent=5 // pred_check_branch
        %323 = sbr.rel (%p321) target = $region48
      $region47: #{outconv_forward.1} parent=5 // pred_region
        %s324 = ssub.s32 %s11, 2
        // Predicated region
        $region49: #{outconv_forward.1} parent=47 // pred_check
          %p325 = pneg %p124
        $region50: #{outconv_forward.1} parent=47 // pred_check_branch
          %327 = sbr.rel (%p325) target = $region52
        $region51: #{outconv_forward.1} parent=47 // pred_region
          %s328 = smul.u32 2, %s23
          %p329 = scmp.lt.s32.totalorder %s22, 1
          %s330 = scalar_select %p329, %s22, 1
          %p331 = scmp.lt.s32.totalorder %s328, 1
          %s332 = scalar_select %p331, %s328, 1
          %s333 = smul.addr %s330, 2
          %s334 = sadd.s32 %s332, %s333
          %s335 = smul.addr %s334, 4
          %s336 = scalar_lea.vmem %s3, %s335
        $region52: #{outconv_forward.1} parent=47 // pred_fallthru
          _
      $region48: #{outconv_forward.1} parent=5 // pred_fallthru
        _
    $region6: #{outconv_forward.1} parent=1 // loop_footer
      %s15 = sadd.s32 1, %s11
    $region7: #{outconv_forward.1} parent=1 // loop_footer_branch
      %10 = sbr.rel target = $region3
    $region8: #{outconv_forward.1} parent=1 // loop_exit
      _
    %337 = vsyncpa [#allocation3], 1
    %s338 = scalar_lea.sflag [#allocation3], 1
    %339 = vsyncpa %s338, 1
    %340 = vsyncpa [#allocation5], 1

</llo_original>
